<compile_context>
chip_gen: v5e
topology: v5e:2x2
jax: 0.10.0
libtpu: 0.0.40
codegen_flags: <defaults>
</compile_context>

<pallas_src>
from functools import partial

import jax
import jax.numpy as jnp
from jax.experimental import pallas as pl
from jax.experimental.pallas import tpu as pltpu

block_size = 8   # T
n_embed = 32     # C


def head_kernel(x_ref, w_ref, o_ref, *, T, H, scale):
    # x_ref: (b_tile*T, C) f32 -- 2D activation slab (no in-kernel x reshape)
    # w_ref: (C, 3H)      f32 -- fused projection weight, columns [wk|wq|wv]
    # o_ref: (b_tile, T, H) f32
    bt = o_ref.shape[0]

    x2d = x_ref[...]                                           # (bt*T, C)

    # --- QKV projection: three MXU matmuls with STATIC weight slices -------
    # (slicing the weight is O(1); slicing the activation at lane offsets
    #  16/32 would force a lane relayout scaling with bt*T)
    k = jnp.dot(x2d, w_ref[:, 0 * H:1 * H], preferred_element_type=jnp.float32)
    q = jnp.dot(x2d, w_ref[:, 1 * H:2 * H], preferred_element_type=jnp.float32)
    v = jnp.dot(x2d, w_ref[:, 2 * H:3 * H], preferred_element_type=jnp.float32)
    # split the leading (sublane-major) dim only; lane dim untouched
    k = k.reshape(bt, T, H)
    q = q.reshape(bt, T, H)
    v = v.reshape(bt, T, H)

    # --- attention scores (reference quirk: scale by n_embed ** -0.5) ------
    wei = jnp.einsum("btd,bsd->bts", q, k,
                     preferred_element_type=jnp.float32) * scale   # (bt,T,T)

    # --- causal mask, built in-kernel (no extra input stream) --------------
    t_idx = jax.lax.broadcasted_iota(jnp.int32, (T, T), 0)   # query index
    s_idx = jax.lax.broadcasted_iota(jnp.int32, (T, T), 1)   # key index
    keep = (t_idx >= s_idx)[None, :, :]
    wei = jnp.where(keep, wei, jnp.float32(-1e30))

    # --- softmax over the QUERY axis (dim=1 of (B,T,T)), as the reference --
    # exact normalization (the approx vrcp path failed the parity check)
    wei = wei - jnp.max(wei, axis=1, keepdims=True)
    p = jnp.exp(wei)
    wei = p / jnp.sum(p, axis=1, keepdims=True)

    # --- weighted value aggregation, one contiguous (bt, T, H) store -------
    o_ref[...] = jnp.einsum("bts,bsh->bth", wei, v,
                            preferred_element_type=jnp.float32)


def _pick_b_tile(B, T, C, H, *, vmem_budget_bytes=24 << 20, max_tile=2048):
    """Largest batch tile that (a) divides B, (b) keeps the per-program VMEM
    footprint (double-buffered blocks + f32 intermediates) under budget, and
    (c) leaves >= 2 grid blocks when possible so v7x's second TensorCore gets
    work via dimension_semantics=("parallel",)."""
    per_row = 4 * (2 * T * C        # x block (double-buffered)
                   + 3 * T * H      # k, q, v
                   + 3 * T * T      # score / exp intermediates
                   + 3 * T * H)     # attention output + double-buffered out block
    cap = int(max(1, min(max_tile, vmem_budget_bytes // per_row)))
    if B <= cap:
        half = B // 2
        # split into two blocks only if the block batch-dim stays a multiple
        # of 8 (keeps the output BlockSpec layout-friendly)
        if B % 2 == 0 and half >= 8 and half % 8 == 0:
            return half
        return B
    for bt in range(cap, 0, -1):    # prefer layout-friendly multiples of 8
        if B % bt == 0 and bt % 8 == 0:
            return bt
    for bt in range(cap, 0, -1):
        if B % bt == 0:
            return bt
    return B


def head_forward(x, wk, wq, wv, *, b_tile=None):
    B, T, C = x.shape
    H = wk.shape[1]

    # fuse the three projection weights into one (C, 3H) matrix [k | q | v]
    w_qkv = jnp.concatenate([wk, wq, wv], axis=1)
    # present x as a 2D (B*T, C) slab so the kernel never reshapes it
    x2d = x.reshape(B * T, C)

    if b_tile is None:
        b_tile = _pick_b_tile(B, T, C, H)
    assert B % b_tile == 0
    nb = B // b_tile

    kernel = partial(head_kernel, T=T, H=H, scale=C ** (-0.5))

    return pl.pallas_call(
        kernel,
        out_shape=jax.ShapeDtypeStruct((B, T, H), jnp.float32),
        grid_spec=pltpu.PrefetchScalarGridSpec(
            num_scalar_prefetch=0,
            grid=(nb,),
            in_specs=[
                pl.BlockSpec((b_tile * T, C), lambda b: (b, 0)),
                pl.BlockSpec((C, 3 * H), lambda b: (0, 0)),
            ],
            out_specs=pl.BlockSpec((b_tile, T, H), lambda b: (b, 0, 0)),
        ),
        compiler_params=pltpu.CompilerParams(
            dimension_semantics=("parallel",),
            vmem_limit_bytes=32 << 20),
    )(x2d, w_qkv)


def reference_forward(x, wk, wq, wv):
    # Pure-JAX mirror of the PyTorch module (high-precision baseline).
    B, T, C = x.shape
    hp = jax.lax.Precision.HIGHEST
    k = jnp.einsum("btc,ch->bth", x, wk, precision=hp)
    q = jnp.einsum("btc,ch->bth", x, wq, precision=hp)
    v = jnp.einsum("btc,ch->bth", x, wv, precision=hp)
    wei = jnp.einsum("bth,bsh->bts", q, k, precision=hp) * (C ** -0.5)
    tril = jnp.tril(jnp.ones((T, T)))
    wei = jnp.where(tril == 0, -jnp.inf, wei)
    wei = jax.nn.softmax(wei, axis=1)   # dim=1, exactly as the reference
    return jnp.einsum("bts,bsh->bth", wei, v, precision=hp)


if __name__ == "__main__":
    head_size = 16
    B, T, C = 2, block_size, n_embed

    key = jax.random.PRNGKey(0)
    kx, kk, kq, kv = jax.random.split(key, 4)
    x = jax.random.normal(kx, (B, T, C), dtype=jnp.float32)
    # deterministic "Linear" weights, stored as (C, head_size) for x @ W
    wk = jax.random.normal(kk, (C, head_size), dtype=jnp.float32) * 0.1
    wq = jax.random.normal(kq, (C, head_size), dtype=jnp.float32) * 0.1
    wv = jax.random.normal(kv, (C, head_size), dtype=jnp.float32) * 0.1

    out = head_forward(x, wk, wq, wv)
    out = jax.block_until_ready(out)

    ref = reference_forward(x, wk, wq, wv)
    assert out.shape == (B, T, head_size)
    # f32 everywhere with exact softmax normalization; tolerance only covers
    # MXU f32-pass rounding differences vs. the HIGHEST-precision reference.
    assert jnp.allclose(out, ref, atol=2e-3, rtol=2e-3), (
        float(jnp.max(jnp.abs(out - ref))))

    print("KERNEL_OK")
</pallas_src>

<mosaic_0001>
module attributes {stable_mosaic.version = 11 : i64} {
  func.func @head_kernel(%arg0: i32, %arg1: memref<16x32xf32, #tpu.memory_space<vmem>>, %arg2: memref<32x48xf32, #tpu.memory_space<vmem>>, %arg3: memref<2x8x16xf32, #tpu.memory_space<vmem>>) attributes {dimension_semantics = [#tpu.dimension_semantics<parallel>], iteration_bounds = array<i64: 1>, scalar_prefetch = 0 : i64, scratch_operands = 0 : i64, tpu.core_type = #tpu.core_type<tc>, window_params = [{transform_indices = @transform_0, window_bounds = array<i64: 16, 32>}, {pipeline_mode = #tpu.pipeline_mode<synchronous>, transform_indices = @transform_1, window_bounds = array<i64: 32, 48>}, {transform_indices = @transform_2, window_bounds = array<i64: 2, 8, 16>}]} {
    %c0 = arith.constant 0 : index
    %c0_0 = arith.constant 0 : index
    %0 = vector.load %arg1[%c0, %c0_0] : memref<16x32xf32, #tpu.memory_space<vmem>>, vector<16x32xf32>
    %c0_1 = arith.constant 0 : index
    %c0_2 = arith.constant 0 : index
    %1 = vector.load %arg2[%c0_1, %c0_2] : memref<32x48xf32, #tpu.memory_space<vmem>>, vector<32x16xf32>
    %cst = arith.constant dense<0.000000e+00> : vector<16x16xf32>
    %2 = tpu.matmul %0, %1, %cst {dimension_numbers = #tpu.dot_dimension_numbers<[1], [0], [0], [1], [0, 0, 1, 1], [], []>} : vector<16x32xf32>, vector<32x16xf32>, vector<16x16xf32> -> vector<16x16xf32>
    %c0_3 = arith.constant 0 : index
    %c16 = arith.constant 16 : index
    %3 = vector.load %arg2[%c0_3, %c16] : memref<32x48xf32, #tpu.memory_space<vmem>>, vector<32x16xf32>
    %cst_4 = arith.constant dense<0.000000e+00> : vector<16x16xf32>
    %4 = tpu.matmul %0, %3, %cst_4 {dimension_numbers = #tpu.dot_dimension_numbers<[1], [0], [0], [1], [0, 0, 1, 1], [], []>} : vector<16x32xf32>, vector<32x16xf32>, vector<16x16xf32> -> vector<16x16xf32>
    %c0_5 = arith.constant 0 : index
    %c32 = arith.constant 32 : index
    %5 = vector.load %arg2[%c0_5, %c32] : memref<32x48xf32, #tpu.memory_space<vmem>>, vector<32x16xf32>
    %cst_6 = arith.constant dense<0.000000e+00> : vector<16x16xf32>
    %6 = tpu.matmul %0, %5, %cst_6 {dimension_numbers = #tpu.dot_dimension_numbers<[1], [0], [0], [1], [0, 0, 1, 1], [], []>} : vector<16x32xf32>, vector<32x16xf32>, vector<16x16xf32> -> vector<16x16xf32>
    %7 = vector.shape_cast %2 : vector<16x16xf32> to vector<2x8x16xf32>
    %8 = vector.shape_cast %4 : vector<16x16xf32> to vector<2x8x16xf32>
    %9 = vector.shape_cast %6 : vector<16x16xf32> to vector<2x8x16xf32>
    "tpu.trace_start"() <{level = 10 : i32, message = "btd,bsd->bts"}> : () -> ()
    %cst_7 = arith.constant dense<0.000000e+00> : vector<2x8x8xf32>
    %10 = tpu.matmul %8, %7, %cst_7 {dimension_numbers = #tpu.dot_dimension_numbers<[2], [2], [1], [1], [0, 0, 0, 1, 1, 1], [0], [0]>} : vector<2x8x16xf32>, vector<2x8x16xf32>, vector<2x8x8xf32> -> vector<2x8x8xf32>
    "tpu.trace_stop"() : () -> ()
    %cst_8 = arith.constant 0.176776692 : f32
    %11 = vector.broadcast %cst_8 : f32 to vector<2x8x8xf32>
    %12 = arith.mulf %10, %11 : vector<2x8x8xf32>
    %13 = tpu.iota {dimensions = array<i32: 0>} : vector<8x8xi32>
    %14 = tpu.iota {dimensions = array<i32: 1>} : vector<8x8xi32>
    %15 = arith.cmpi sge, %13, %14 : vector<8x8xi32>
    %16 = vector.shape_cast %15 : vector<8x8xi1> to vector<1x8x8xi1>
    %cst_9 = arith.constant -1.000000e+30 : f32
    %17 = vector.shape_cast %16 : vector<1x8x8xi1> to vector<1x8x8xi1>
    %18 = vector.broadcast %17 : vector<1x8x8xi1> to vector<2x8x8xi1>
    %19 = vector.broadcast %cst_9 : f32 to vector<2x8x8xf32>
    %20 = arith.select %18, %12, %19 : vector<2x8x8xi1>, vector<2x8x8xf32>
    %cst_10 = arith.constant dense<0xFF800000> : vector<2x8xf32>
    %21 = vector.multi_reduction <maximumf>, %20, %cst_10 [1] : vector<2x8x8xf32> to vector<2x8xf32>
    %22 = vector.shape_cast %21 : vector<2x8xf32> to vector<2x1x8xf32>
    %23 = vector.broadcast %22 : vector<2x1x8xf32> to vector<2x8x8xf32>
    %24 = arith.subf %20, %23 : vector<2x8x8xf32>
    %25 = math.exp %24 : vector<2x8x8xf32>
    %cst_11 = arith.constant dense<0.000000e+00> : vector<2x8xf32>
    %26 = vector.multi_reduction <add>, %25, %cst_11 [1] : vector<2x8x8xf32> to vector<2x8xf32>
    %27 = vector.shape_cast %26 : vector<2x8xf32> to vector<2x1x8xf32>
    %28 = vector.broadcast %27 : vector<2x1x8xf32> to vector<2x8x8xf32>
    %29 = arith.divf %25, %28 : vector<2x8x8xf32>
    "tpu.trace_start"() <{level = 10 : i32, message = "bts,bsh->bth"}> : () -> ()
    %cst_12 = arith.constant dense<0.000000e+00> : vector<2x8x16xf32>
    %30 = tpu.matmul %29, %9, %cst_12 {dimension_numbers = #tpu.dot_dimension_numbers<[2], [1], [1], [2], [0, 0, 0, 1, 1, 2], [0], [0]>} : vector<2x8x8xf32>, vector<2x8x16xf32>, vector<2x8x16xf32> -> vector<2x8x16xf32>
    "tpu.trace_stop"() : () -> ()
    %c0_13 = arith.constant 0 : index
    %c0_14 = arith.constant 0 : index
    %c0_15 = arith.constant 0 : index
    %31 = vector.load %arg3[%c0_13, %c0_14, %c0_15] : memref<2x8x16xf32, #tpu.memory_space<vmem>>, vector<2x8x16xf32>
    tpu.vector_store %arg3[%c0_13, %c0_14, %c0_15], %30 {strides = array<i32>} : memref<2x8x16xf32, #tpu.memory_space<vmem>>, vector<2x8x16xf32>,
    return
  }
  func.func @transform_0(%arg0: i32) -> (i32, i32) {
    %c0_i32 = arith.constant 0 : i32
    %c0_i32_0 = arith.constant 0 : i32
    return %arg0, %c0_i32 : i32, i32
  }
  func.func @transform_1(%arg0: i32) -> (i32, i32) {
    %c0_i32 = arith.constant 0 : i32
    %c0_i32_0 = arith.constant 0 : i32
    %c0_i32_1 = arith.constant 0 : i32
    return %c0_i32, %c0_i32_0 : i32, i32
  }
  func.func @transform_2(%arg0: i32) -> (i32, i32, i32) {
    %c0_i32 = arith.constant 0 : i32
    %c0_i32_0 = arith.constant 0 : i32
    %c0_i32_1 = arith.constant 0 : i32
    return %arg0, %c0_i32, %c0_i32_0 : i32, i32, i32
  }
}

</mosaic_0001>

<llo_original>
// kernel: tpu_custom_call.1
$region0: #{tpu_custom_call.1}
  #allocation0 [shape = 'u32[]', space=smem, size = 0x4, offset = 0x4, fixed_abs, tag = 'smem constant byte address 0x4 - core index']
  #allocation1 [shape = 'u32[72,128]{1,0:T(1,128)}', space=vmem, size = 0x9000, scoped, tag = 'internal scratch']
  %s0 = inlined_call_operand.hbm [shape: f32[16,32], index: 0, kind: input, shape index: {}]
  %s1 = inlined_call_operand.hbm [shape: f32[32,48], index: 1, kind: input, shape index: {}]
  %s2 = inlined_call_operand.hbm [shape: f32[2,8,16], index: 2, kind: output, shape index: {}]
  %s3 = sld [smem:[#allocation0]]
  $region26: #{tpu_custom_call.1} parent=0
    _
  %s5 = ssub.s32 1, %s3
  %s6 = scalar_select 0, %s5, %s3
  $region1: #{tpu_custom_call.1} parent=0
    #allocation2 [shape = 'u8[8192]{0}', space=vmem, size = 0x2000, scoped, tag = 'input window, operand 0, single buffered']
    #allocation3 [shape = 's32[1]{0}', space=sflag, size = 0x4, scoped, tag = 'scoped memory for tpu_custom_call.1']
    #allocation4 [shape = 's32[1]{0}', space=sflag, size = 0x4, scoped, tag = 'scoped memory for tpu_custom_call.1']
    #allocation5 [shape = 'u8[16384]{0}', space=vmem, size = 0x4000, scoped, tag = 'input window, operand 1, single buffered']
    #allocation6 [shape = 's32[1]{0}', space=sflag, size = 0x4, scoped, tag = 'scoped memory for tpu_custom_call.1']
    #allocation7 [shape = 'u8[8192]{0}', space=vmem, size = 0x2000, scoped, tag = 'output window, operand 0, single buffered']
    %7 = vsyncpa [#allocation3], 0
    %8 = vsyncpa [#allocation6], 0
    %9 = vsyncpa [#allocation4], 0
    // Predicated region
    $region2: #{tpu_custom_call.1} parent=1 // pred_check
      _
    $region3: #{tpu_custom_call.1} parent=1 // pred_check_branch
      %11 = sbr.rel (0) target = $region5
    $region4: #{tpu_custom_call.1} parent=1 // pred_region
      %13 = vsyncadd [#allocation3], 0
      %s14 = sshll.u32 %s0, 4
      %s15 = int_to_ptr.hbm [resolvable:$true] %s14
      %s16 = sshll.u32 [#allocation2], 4
      %s17 = int_to_ptr.vmem [resolvable:$true] %s16
      %22 = dma.hbm_to_vmem [thread:$0]  %s15, 256, %s17, [#allocation3], 128, 128, 8
    $region5: #{tpu_custom_call.1} parent=1 // pred_fallthru
      _
    // Predicated region
    $region6: #{tpu_custom_call.1} parent=1 // pred_check
      _
    $region7: #{tpu_custom_call.1} parent=1 // pred_check_branch
      %24 = sbr.rel (0) target = $region9
    $region8: #{tpu_custom_call.1} parent=1 // pred_region
      %26 = vsyncadd [#allocation6], 0
      %s27 = sshll.u32 %s1, 4
      %s28 = int_to_ptr.hbm [resolvable:$true] %s27
      %s29 = sshll.u32 [#allocation5], 4
      %s30 = int_to_ptr.vmem [resolvable:$true] %s29
      %35 = dma.hbm_to_vmem [thread:$0]  %s28, 512, %s30, [#allocation6], 128, 128, 8
    $region9: #{tpu_custom_call.1} parent=1 // pred_fallthru
      _
    // Predicated region
    $region10: #{tpu_custom_call.1} parent=1 // pred_check
      _
    $region11: #{tpu_custom_call.1} parent=1 // pred_check_branch
      %37 = sbr.rel (0) target = $region13
    $region12: #{tpu_custom_call.1} parent=1 // pred_region
      %39 = dma.done [#allocation3], 256
    $region13: #{tpu_custom_call.1} parent=1 // pred_fallthru
      _
    // Predicated region
    $region14: #{tpu_custom_call.1} parent=1 // pred_check
      _
    $region15: #{tpu_custom_call.1} parent=1 // pred_check_branch
      %41 = sbr.rel (0) target = $region17
    $region16: #{tpu_custom_call.1} parent=1 // pred_region
      %43 = dma.done [#allocation6], 512
    $region17: #{tpu_custom_call.1} parent=1 // pred_fallthru
      _
    %v44 = vld [vmem:[#allocation2] sm:$0xff]
    %v45 = vld [vmem:[#allocation2 + $0x8] sm:$0xff]
    %v46 = vld [vmem:[#allocation5] sm:$0xff]
    %v47 = vld [vmem:[#allocation5 + $0x8] sm:$0xff]
    %v48 = vld [vmem:[#allocation5 + $0x10] sm:$0xff]
    %v49 = vld [vmem:[#allocation5 + $0x18] sm:$0xff]
    %vm50 = vcmask 261120
    %v52 = vsel %vm50, %v44, 0
    %v55 = vsel %vm50, %v45, 0
    %57 = vmatpush.msra.mxu0 0.0
    %58 = vmatpush.msra.mxu0 0.0
    %59 = vmatpush.msra.mxu0 0.0
    %60 = vmatpush.msra.mxu0 0.0
    %61 = vmatpush.msra.mxu0 0.0
    %62 = vmatpush.msra.mxu0 0.0
    %63 = vmatpush.msra.mxu0 0.0
    %64 = vmatpush.msra.mxu0 0.0
    %65 = vmatpush.msra.mxu0 0.0
    %66 = vmatpush.msra.mxu0 0.0
    %67 = vmatpush.msra.mxu0 0.0
    %68 = vmatpush.msra.mxu0 0.0
    %69 = vmatpush.msra.mxu0 %v49
    %70 = vmatpush.msra.mxu0 %v48
    %71 = vmatpush.msra.mxu0 %v47
    %72 = vmatpush.msra.mxu0 %v46
    %73 = vmatmul.f32.gmra.mxu0 %v52
    %v74 = vpop.f32.mrf.mxu0
    %v75 = vadd.f32 0.0, %v74
    %76 = vmatmul.f32.gmra.mxu0 %v55
    %v77 = vpop.f32.mrf.mxu0
    %v78 = vadd.f32 0.0, %v77
    %79 = vdwg.mxu0
    %84 = vrot.lane.b32.xlu0 %v46, 112
    %v85 = vpop.permute.xlu0 %84
    %86 = vrot.lane.b32.xlu0 %v47, 112
    %v87 = vpop.permute.xlu0 %86
    %88 = vrot.lane.b32.xlu0 %v48, 112
    %v89 = vpop.permute.xlu0 %88
    %90 = vrot.lane.b32.xlu0 %v49, 112
    %v91 = vpop.permute.xlu0 %90
    %96 = vmatpush.msra.mxu0 0.0
    %97 = vmatpush.msra.mxu0 0.0
    %98 = vmatpush.msra.mxu0 0.0
    %99 = vmatpush.msra.mxu0 0.0
    %100 = vmatpush.msra.mxu0 0.0
    %101 = vmatpush.msra.mxu0 0.0
    %102 = vmatpush.msra.mxu0 0.0
    %103 = vmatpush.msra.mxu0 0.0
    %104 = vmatpush.msra.mxu0 0.0
    %105 = vmatpush.msra.mxu0 0.0
    %106 = vmatpush.msra.mxu0 0.0
    %107 = vmatpush.msra.mxu0 0.0
    %108 = vmatpush.msra.mxu0 %v91
    %109 = vmatpush.msra.mxu0 %v89
    %110 = vmatpush.msra.mxu0 %v87
    %111 = vmatpush.msra.mxu0 %v85
    %112 = vmatmul.f32.gmra.mxu0 %v52
    %v113 = vpop.f32.mrf.mxu0
    %v114 = vadd.f32 0.0, %v113
    %115 = vmatmul.f32.gmra.mxu0 %v55
    %v116 = vpop.f32.mrf.mxu0
    %v117 = vadd.f32 0.0, %v116
    %118 = vdwg.mxu0
    %119 = vrot.lane.b32.xlu0 %v46, 96
    %v120 = vpop.permute.xlu0 %119
    %121 = vrot.lane.b32.xlu0 %v47, 96
    %v122 = vpop.permute.xlu0 %121
    %123 = vrot.lane.b32.xlu0 %v48, 96
    %v124 = vpop.permute.xlu0 %123
    %125 = vrot.lane.b32.xlu0 %v49, 96
    %v126 = vpop.permute.xlu0 %125
    %131 = vmatpush.msra.mxu0 0.0
    %132 = vmatpush.msra.mxu0 0.0
    %133 = vmatpush.msra.mxu0 0.0
    %134 = vmatpush.msra.mxu0 0.0
    %135 = vmatpush.msra.mxu0 0.0
    %136 = vmatpush.msra.mxu0 0.0
    %137 = vmatpush.msra.mxu0 0.0
    %138 = vmatpush.msra.mxu0 0.0
    %139 = vmatpush.msra.mxu0 0.0
    %140 = vmatpush.msra.mxu0 0.0
    %141 = vmatpush.msra.mxu0 0.0
    %142 = vmatpush.msra.mxu0 0.0
    %143 = vmatpush.msra.mxu0 %v126
    %144 = vmatpush.msra.mxu0 %v124
    %145 = vmatpush.msra.mxu0 %v122
    %146 = vmatpush.msra.mxu0 %v120
    %147 = vmatmul.f32.gmra.mxu0 %v52
    %v148 = vpop.f32.mrf.mxu0
    %v149 = vadd.f32 0.0, %v148
    %150 = vmatmul.f32.gmra.mxu0 %v55
    %v151 = vpop.f32.mrf.mxu0
    %v152 = vadd.f32 0.0, %v151
    %153 = vdwg.mxu0
    %vm154 = vcmask 130048
    %v156 = vsel %vm154, %v114, 0
    %v159 = vsel %vm154, %v75, 0
    %161 = vmatpush.xpose.msra.mxu0 0.0
    %162 = vmatpush.xpose.msra.mxu0 0.0
    %163 = vmatpush.xpose.msra.mxu0 0.0
    %164 = vmatpush.xpose.msra.mxu0 0.0
    %165 = vmatpush.xpose.msra.mxu0 0.0
    %166 = vmatpush.xpose.msra.mxu0 0.0
    %167 = vmatpush.xpose.msra.mxu0 0.0
    %168 = vmatpush.xpose.msra.mxu0 0.0
    %169 = vmatpush.xpose.msra.mxu0 0.0
    %170 = vmatpush.xpose.msra.mxu0 0.0
    %171 = vmatpush.xpose.msra.mxu0 0.0
    %172 = vmatpush.xpose.msra.mxu0 0.0
    %173 = vmatpush.xpose.msra.mxu0 0.0
    %174 = vmatpush.xpose.msra.mxu0 0.0
    %175 = vmatpush.xpose.msra.mxu0 0.0
    %176 = vmatpush.xpose.msra.mxu0 %v159
    %177 = vmatmul.f32.gmra.mxu0 %v156
    %v178 = vpop.f32.mrf.mxu0
    %v179 = vadd.f32 0.0, %v178
    %180 = vdwg.mxu0
    %v182 = vsel %vm154, %v117, 0
    %v185 = vsel %vm154, %v78, 0
    %187 = vmatpush.xpose.msra.mxu0 0.0
    %188 = vmatpush.xpose.msra.mxu0 0.0
    %189 = vmatpush.xpose.msra.mxu0 0.0
    %190 = vmatpush.xpose.msra.mxu0 0.0
    %191 = vmatpush.xpose.msra.mxu0 0.0
    %192 = vmatpush.xpose.msra.mxu0 0.0
    %193 = vmatpush.xpose.msra.mxu0 0.0
    %194 = vmatpush.xpose.msra.mxu0 0.0
    %195 = vmatpush.xpose.msra.mxu0 0.0
    %196 = vmatpush.xpose.msra.mxu0 0.0
    %197 = vmatpush.xpose.msra.mxu0 0.0
    %198 = vmatpush.xpose.msra.mxu0 0.0
    %199 = vmatpush.xpose.msra.mxu0 0.0
    %200 = vmatpush.xpose.msra.mxu0 0.0
    %201 = vmatpush.xpose.msra.mxu0 0.0
    %202 = vmatpush.xpose.msra.mxu0 %v185
    %203 = vmatmul.f32.gmra.mxu0 %v182
    %v204 = vpop.f32.mrf.mxu0
    %v205 = vadd.f32 0.0, %v204
    %206 = vdwg.mxu0
    %v207 = vmul.f32 %v179, 0.17677669
    %v208 = vmul.f32 %v205, 0.17677669
    %v209 = vlaneseq
    %v210 = vshrl.u32 %v209, 7
    %v211 = vlaneseq
    %v212 = vand.u32 %v211, 127
    %vm213 = vcmp.ge.s32.totalorder %v210, %v212
    %v214 = vsel %vm213, 1, 0
    %vm215 = vcmp.eq.s32.totalorder %v214, 1
    %v216 = vsel %vm215, %v207, -1e+30
    %v217 = vsel %vm215, %v208, -1e+30
    %vm218 = vcmask 64512
    %v219 = vsel %vm218, %v216, -inf
    %v220 = vrot.slane %v219, 4
    %v221 = vmax.f32 %v219, %v220
    %v222 = vrot.slane %v221, 2
    %v223 = vmax.f32 %v221, %v222
    %v224 = vrot.slane %v223, 1
    %v225 = vmax.f32 %v223, %v224
    %v226 = vsel %vm218, %v217, -inf
    %v227 = vrot.slane %v226, 4
    %v228 = vmax.f32 %v226, %v227
    %v229 = vrot.slane %v228, 2
    %v230 = vmax.f32 %v228, %v229
    %v231 = vrot.slane %v230, 1
    %v232 = vmax.f32 %v230, %v231
    %v233 = vsub.f32 %v216, %v225
    %v234 = vsub.f32 %v217, %v232
    %v235 = vmul.f32 %v233, 1.442695
    %v236 = vpow.pop %v235
    %v237 = vmul.f32 %v234, 1.442695
    %v238 = vpow.pop %v237
    %v239 = vsel %vm218, %v236, 0.0
    %v240 = vrot.slane %v239, 4
    %v241 = vadd.f32 %v239, %v240
    %v242 = vrot.slane %v241, 2
    %v243 = vadd.f32 %v241, %v242
    %v244 = vrot.slane %v243, 1
    %v245 = vadd.f32 %v243, %v244
    %v246 = vsel %vm218, %v238, 0.0
    %v247 = vrot.slane %v246, 4
    %v248 = vadd.f32 %v246, %v247
    %v249 = vrot.slane %v248, 2
    %v250 = vadd.f32 %v248, %v249
    %v251 = vrot.slane %v250, 1
    %v252 = vadd.f32 %v250, %v251
    %v253 = vrcp.pop %v245
    %v254 = vmul.f32 %v245, %v253
    %v255 = vsub.f32 1.0, %v254
    %v256 = vmul.f32 %v253, %v255
    %v257 = vadd.f32 %v253, %v256
    %vm258 = vweird.f32 %v245
    %vm259 = vweird.f32 %v253
    %vm260 = vmor %vm258, %vm259
    %v261 = vsel %vm260, %v253, %v257
    %v262 = vand.u32 2147483647, %v245
    %vm263 = vcmp.eq.f32.partialorder %v262, 8.507059e+37
    %v264 = vand.u32 %v245, 2147483648
    %v265 = vor.u32 1.1754944e-38, %v264
    %v266 = vsel %vm263, %v265, %v261
    %v267 = vmul.f32 %v236, %v266
    %v268 = vrcp.pop %v252
    %v269 = vmul.f32 %v252, %v268
    %v270 = vsub.f32 1.0, %v269
    %v271 = vmul.f32 %v268, %v270
    %v272 = vadd.f32 %v268, %v271
    %vm273 = vweird.f32 %v252
    %vm274 = vweird.f32 %v268
    %vm275 = vmor %vm273, %vm274
    %v276 = vsel %vm275, %v268, %v272
    %v277 = vand.u32 2147483647, %v252
    %vm278 = vcmp.eq.f32.partialorder %v277, 8.507059e+37
    %v279 = vand.u32 %v252, 2147483648
    %v280 = vor.u32 1.1754944e-38, %v279
    %v281 = vsel %vm278, %v280, %v276
    %v282 = vmul.f32 %v238, %v281
    %v284 = vsel %vm218, %v267, 0
    %286 = vmatpush.msra.mxu0 0.0
    %287 = vmatpush.msra.mxu0 0.0
    %288 = vmatpush.msra.mxu0 0.0
    %289 = vmatpush.msra.mxu0 0.0
    %290 = vmatpush.msra.mxu0 0.0
    %291 = vmatpush.msra.mxu0 0.0
    %292 = vmatpush.msra.mxu0 0.0
    %293 = vmatpush.msra.mxu0 0.0
    %294 = vmatpush.msra.mxu0 0.0
    %295 = vmatpush.msra.mxu0 0.0
    %296 = vmatpush.msra.mxu0 0.0
    %297 = vmatpush.msra.mxu0 0.0
    %298 = vmatpush.msra.mxu0 0.0
    %299 = vmatpush.msra.mxu0 0.0
    %300 = vmatpush.msra.mxu0 0.0
    %301 = vmatpush.msra.mxu0 %v149
    %302 = vmatmul.f32.gmra.mxu0 %v284
    %v303 = vpop.f32.mrf.mxu0
    %v304 = vadd.f32 0.0, %v303
    %305 = vdwg.mxu0
    %v307 = vsel %vm218, %v282, 0
    %309 = vmatpush.msra.mxu0 0.0
    %310 = vmatpush.msra.mxu0 0.0
    %311 = vmatpush.msra.mxu0 0.0
    %312 = vmatpush.msra.mxu0 0.0
    %313 = vmatpush.msra.mxu0 0.0
    %314 = vmatpush.msra.mxu0 0.0
    %315 = vmatpush.msra.mxu0 0.0
    %316 = vmatpush.msra.mxu0 0.0
    %317 = vmatpush.msra.mxu0 0.0
    %318 = vmatpush.msra.mxu0 0.0
    %319 = vmatpush.msra.mxu0 0.0
    %320 = vmatpush.msra.mxu0 0.0
    %321 = vmatpush.msra.mxu0 0.0
    %322 = vmatpush.msra.mxu0 0.0
    %323 = vmatpush.msra.mxu0 0.0
    %324 = vmatpush.msra.mxu0 %v152
    %325 = vmatmul.f32.gmra.mxu0 %v307
    %v326 = vpop.f32.mrf.mxu0
    %v327 = vadd.f32 0.0, %v326
    %328 = vdwg.mxu0
    %329 = vst.msk [vmem:[#allocation7] sm:$0xff] %vm154, %v304
    %330 = vst.msk [vmem:[#allocation7 + $0x8] sm:$0xff] %vm154, %v327
    // Predicated region
    $region18: #{tpu_custom_call.1} parent=1 // pred_check
      _
    $region19: #{tpu_custom_call.1} parent=1 // pred_check_branch
      %332 = sbr.rel (0) target = $region21
    $region20: #{tpu_custom_call.1} parent=1 // pred_region
      %334 = vsyncadd [#allocation4], 0
      %s335 = sshll.u32 [#allocation7], 4
      %s336 = int_to_ptr.vmem [resolvable:$true] %s335
      %s337 = sshll.u32 %s2, 4
      %s338 = int_to_ptr.hbm [resolvable:$true] %s337
      %343 = dma.vmem_to_hbm [thread:$0]  %s336, 256, %s338, [#allocation4], 128, 128, 8
    $region21: #{tpu_custom_call.1} parent=1 // pred_fallthru
      _
    // Predicated region
    $region22: #{tpu_custom_call.1} parent=1 // pred_check
      _
    $region23: #{tpu_custom_call.1} parent=1 // pred_check_branch
      %345 = sbr.rel (0) target = $region25
    $region24: #{tpu_custom_call.1} parent=1 // pred_region
      %347 = dma.done [#allocation4], 256
    $region25: #{tpu_custom_call.1} parent=1 // pred_fallthru
      _
    %348 = vsyncpa [#allocation3], 1
    %349 = vsyncpa [#allocation6], 1
    %350 = vsyncpa [#allocation4], 1

</llo_original>
